<compile_context>
chip_gen: v7x
topology: tpu7x:2x2x1
jax: 0.10.0
libtpu: 0.0.40
codegen_flags: <defaults>
</compile_context>

<pallas_src>
import numpy as np
import jax
import jax.numpy as jnp
from jax.experimental import pallas as pl
from jax.experimental.pallas import tpu as pltpu


def _shallow_kernel(x_ref, wconv_ref, bconv_ref, mpool_ref, wcls_ref, bcls_ref, o_ref):
    """One batch block (TB trials) per grid step; everything is 2-D and lane-dense.

    x_ref    : (TB, T*C)        flattened trials (time-major, channel-minor)
    wconv_ref: (T*C, Tp*G)      fused conv_time+conv_spat Toeplitz weight
    bconv_ref: (1, Tp*G)        fused conv bias (conv_time bias folded through conv_spat)
    mpool_ref: (Tp*G, Npool*G)  average-pool matrix with 1/Pl folded in
    wcls_ref : (Npool*G, Nc)    classifier conv weight
    bcls_ref : (1, Nc)          classifier bias
    o_ref    : (TB, Nc)         output logits
    """
    # Fused conv_time -> conv_spat (+ bias): one MXU matmul.
    z = jnp.dot(x_ref[...], wconv_ref[...], preferred_element_type=jnp.float32)
    z = z + bconv_ref[...]
    # conv_nonlin: square.
    z = z * z
    # AvgPool2d over time as one matmul (scale folded into the matrix).
    pooled = jnp.dot(z, mpool_ref[...], preferred_element_type=jnp.float32)
    # pool_nonlin: safe log.
    logp = jnp.log(jnp.maximum(pooled, 1e-6))
    # conv_classifier: single matmul with contraction K = Npool*G.
    out = jnp.dot(logp, wcls_ref[...], preferred_element_type=jnp.float32) + bcls_ref[...]
    o_ref[...] = out.astype(o_ref.dtype)


def _round_up(a, m):
    return (a + m - 1) // m * m


def shallow_model_forward(x_nchw, params, *, pool_time_length, pool_time_stride,
                          block_b=128):
    """Pallas implementation of ShallowModel.forward.  x_nchw: (B, 1, T, C)."""
    (w_time, b_time, w_spat, b_spat, w_cls, b_cls) = params
    B, _, T, C = x_nchw.shape
    F, _, Kt, _ = w_time.shape
    G = w_spat.shape[0]
    Nc, _, Npool_w, _ = w_cls.shape
    Pl, Ps = pool_time_length, pool_time_stride
    Tp = T - Kt + 1                        # time length after conv_time
    Npool = (Tp - Pl) // Ps + 1            # == final_conv_length
    assert Npool == Npool_w
    f32 = jnp.float32

    # ---------------- host-side weight fusion ----------------
    wt = jnp.transpose(w_time.reshape(F, Kt)).astype(f32)                    # (Kt, F)
    ws = jnp.transpose(w_spat.reshape(G, F, C), (2, 1, 0)).astype(f32)       # (C, F, G)
    # Wcomb[k,c,g] = sum_f wt[k,f] * ws[c,f,g]
    wcomb = jnp.einsum('kf,cfg->kcg', wt, ws)                                # (Kt, C, G)
    # conv_time bias folded through conv_spat, added to conv_spat bias.
    bcomb = b_spat.astype(f32) + jnp.einsum('f,cfg->g', b_time.astype(f32), ws)   # (G,)

    # Toeplitz expansion: W_conv[i*C+c, t*G+g] = Wcomb[i-t, c, g] for 0 <= i-t < Kt.
    sel = (jnp.arange(T)[None, :, None] ==
           (jnp.arange(Tp)[None, None, :] + jnp.arange(Kt)[:, None, None])).astype(f32)  # (Kt, T, Tp)
    w_conv2d = jnp.einsum('kit,kcg->ictg', sel, wcomb).reshape(T * C, Tp * G)
    b_conv2d = jnp.tile(bcomb.reshape(1, G), (1, Tp))                        # (1, Tp*G)

    # Pooling matrix (0/1 window membership) with 1/Pl folded in, expanded to (Tp*G, Npool*G).
    t_idx = jnp.arange(Tp)[None, :]
    p_idx = jnp.arange(Npool)[:, None]
    pm = ((t_idx >= p_idx * Ps) & (t_idx < p_idx * Ps + Pl)).astype(f32) / Pl   # (Npool, Tp)
    m_pool = jnp.einsum('pt,gh->tgph', pm, jnp.eye(G, dtype=f32)).reshape(Tp * G, Npool * G)

    # Classifier conv spans the full pooled time axis -> single matmul weight.
    w_cls2d = jnp.transpose(w_cls.reshape(Nc, G, Npool), (2, 1, 0)).reshape(Npool * G, Nc).astype(f32)
    b_cls2d = b_cls.reshape(1, Nc).astype(f32)

    # ---------------- batch blocking ----------------
    x2d = x_nchw.reshape(B, T * C).astype(f32)             # flattened trials, lane-dense
    TB = _round_up(min(block_b, _round_up(B, 8)), 8)       # multiple of 8 sublanes
    B_pad = _round_up(B, TB)
    if B_pad != B:
        x2d = jnp.pad(x2d, ((0, B_pad - B), (0, 0)))       # padded trials are discarded below

    out = pl.pallas_call(
        _shallow_kernel,
        out_shape=jax.ShapeDtypeStruct((B_pad, Nc), jnp.float32),
        grid=(B_pad // TB,),
        in_specs=[
            pl.BlockSpec((TB, T * C), lambda i: (i, 0)),
            pl.BlockSpec((T * C, Tp * G), lambda i: (0, 0)),
            pl.BlockSpec((1, Tp * G), lambda i: (0, 0)),
            pl.BlockSpec((Tp * G, Npool * G), lambda i: (0, 0)),
            pl.BlockSpec((Npool * G, Nc), lambda i: (0, 0)),
            pl.BlockSpec((1, Nc), lambda i: (0, 0)),
        ],
        out_specs=pl.BlockSpec((TB, Nc), lambda i: (i, 0)),
        compiler_params=pltpu.CompilerParams(dimension_semantics=("parallel",)),
    )(x2d, w_conv2d, b_conv2d, m_pool, w_cls2d, b_cls2d)
    return out[:B]


def reference_forward(x_nchw, params, *, pool_time_length, pool_time_stride):
    """Pure-JAX (XLA) reference mirroring the PyTorch module."""
    (w_time, b_time, w_spat, b_spat, w_cls, b_cls) = params
    dn = ("NCHW", "OIHW", "NCHW")
    Pl, Ps = pool_time_length, pool_time_stride
    y = jax.lax.conv_general_dilated(x_nchw, w_time, (1, 1), "VALID",
                                     dimension_numbers=dn) + b_time[None, :, None, None]
    y = jax.lax.conv_general_dilated(y, w_spat, (1, 1), "VALID",
                                     dimension_numbers=dn) + b_spat[None, :, None, None]
    y = y * y
    y = jax.lax.reduce_window(y, 0.0, jax.lax.add,
                              (1, 1, Pl, 1), (1, 1, Ps, 1), "VALID") / Pl
    y = jnp.log(jnp.maximum(y, 1e-6))
    y = jax.lax.conv_general_dilated(y, w_cls, (1, 1), "VALID",
                                     dimension_numbers=dn) + b_cls[None, :, None, None]
    return y.reshape(y.shape[0], -1)


if __name__ == "__main__":
    # Small hyper-parameters consistent with the module's constructor arguments.
    B = 2
    in_chans = 4               # C
    input_time_length = 64     # T
    n_classes = 3
    n_filters_time = 8         # F
    filter_time_length = 9     # Kt
    n_filters_spat = 8         # G
    pool_time_length = 12      # Pl
    pool_time_stride = 8       # Ps

    Tp = input_time_length - filter_time_length + 1
    final_conv_length = (Tp - pool_time_length) // pool_time_stride + 1   # Npool

    key = jax.random.PRNGKey(0)
    kx, k1, k2, k3, k4, k5, k6 = jax.random.split(key, 7)

    x = jax.random.normal(kx, (B, 1, input_time_length, in_chans), jnp.float32)

    params = (
        jax.random.normal(k1, (n_filters_time, 1, filter_time_length, 1), jnp.float32) * 0.1,
        jax.random.normal(k2, (n_filters_time,), jnp.float32) * 0.1,
        jax.random.normal(k3, (n_filters_spat, n_filters_time, 1, in_chans), jnp.float32) * 0.1,
        jax.random.normal(k4, (n_filters_spat,), jnp.float32) * 0.1,
        jax.random.normal(k5, (n_classes, n_filters_spat, final_conv_length, 1), jnp.float32) * 0.1,
        jax.random.normal(k6, (n_classes,), jnp.float32) * 0.1,
    )

    out = shallow_model_forward(x, params,
                                pool_time_length=pool_time_length,
                                pool_time_stride=pool_time_stride)
    out = jax.block_until_ready(out)

    ref = reference_forward(x, params,
                            pool_time_length=pool_time_length,
                            pool_time_stride=pool_time_stride)
    np.testing.assert_allclose(np.asarray(out), np.asarray(ref), rtol=2e-2, atol=2e-2)

    print("KERNEL_OK")
</pallas_src>

<mosaic_0001>
module attributes {stable_mosaic.version = 11 : i64} {
  func.func @_shallow_kernel(%arg0: i32, %arg1: memref<8x256xf32, #tpu.memory_space<vmem>>, %arg2: memref<256x448xf32, #tpu.memory_space<vmem>>, %arg3: memref<1x448xf32, #tpu.memory_space<vmem>>, %arg4: memref<448x48xf32, #tpu.memory_space<vmem>>, %arg5: memref<48x3xf32, #tpu.memory_space<vmem>>, %arg6: memref<1x3xf32, #tpu.memory_space<vmem>>, %arg7: memref<8x3xf32, #tpu.memory_space<vmem>>) attributes {dimension_semantics = [#tpu.dimension_semantics<parallel>], iteration_bounds = array<i64: 1>, scalar_prefetch = 0 : i64, scratch_operands = 0 : i64, tpu.core_type = #tpu.core_type<tc>, window_params = [{transform_indices = @transform_0, window_bounds = array<i64: 8, 256>}, {pipeline_mode = #tpu.pipeline_mode<synchronous>, transform_indices = @transform_1, window_bounds = array<i64: 256, 448>}, {pipeline_mode = #tpu.pipeline_mode<synchronous>, transform_indices = @transform_2, window_bounds = array<i64: 1, 448>}, {pipeline_mode = #tpu.pipeline_mode<synchronous>, transform_indices = @transform_3, window_bounds = array<i64: 448, 48>}, {pipeline_mode = #tpu.pipeline_mode<synchronous>, transform_indices = @transform_4, window_bounds = array<i64: 48, 3>}, {pipeline_mode = #tpu.pipeline_mode<synchronous>, transform_indices = @transform_5, window_bounds = array<i64: 1, 3>}, {transform_indices = @transform_6, window_bounds = array<i64: 8, 3>}]} {
    %c0 = arith.constant 0 : index
    %c0_0 = arith.constant 0 : index
    %0 = vector.load %arg1[%c0, %c0_0] : memref<8x256xf32, #tpu.memory_space<vmem>>, vector<8x256xf32>
    %c0_1 = arith.constant 0 : index
    %c0_2 = arith.constant 0 : index
    %1 = vector.load %arg2[%c0_1, %c0_2] : memref<256x448xf32, #tpu.memory_space<vmem>>, vector<256x448xf32>
    %cst = arith.constant dense<0.000000e+00> : vector<8x448xf32>
    %2 = tpu.matmul %0, %1, %cst {dimension_numbers = #tpu.dot_dimension_numbers<[1], [0], [0], [1], [0, 0, 1, 1], [], []>} : vector<8x256xf32>, vector<256x448xf32>, vector<8x448xf32> -> vector<8x448xf32>
    %c0_3 = arith.constant 0 : index
    %c0_4 = arith.constant 0 : index
    %3 = vector.load %arg3[%c0_3, %c0_4] : memref<1x448xf32, #tpu.memory_space<vmem>>, vector<1x448xf32>
    %4 = vector.broadcast %3 : vector<1x448xf32> to vector<8x448xf32>
    %5 = arith.addf %2, %4 : vector<8x448xf32>
    %6 = arith.mulf %5, %5 : vector<8x448xf32>
    %c0_5 = arith.constant 0 : index
    %c0_6 = arith.constant 0 : index
    %7 = vector.load %arg4[%c0_5, %c0_6] : memref<448x48xf32, #tpu.memory_space<vmem>>, vector<448x48xf32>
    %cst_7 = arith.constant dense<0.000000e+00> : vector<8x48xf32>
    %8 = tpu.matmul %6, %7, %cst_7 {dimension_numbers = #tpu.dot_dimension_numbers<[1], [0], [0], [1], [0, 0, 1, 1], [], []>} : vector<8x448xf32>, vector<448x48xf32>, vector<8x48xf32> -> vector<8x48xf32>
    %cst_8 = arith.constant 9.99999997E-7 : f32
    %9 = vector.broadcast %cst_8 : f32 to vector<8x48xf32>
    %10 = arith.maximumf %8, %9 : vector<8x48xf32>
    %11 = math.log %10 : vector<8x48xf32>
    %c0_9 = arith.constant 0 : index
    %c0_10 = arith.constant 0 : index
    %12 = vector.load %arg5[%c0_9, %c0_10] : memref<48x3xf32, #tpu.memory_space<vmem>>, vector<48x3xf32>
    %cst_11 = arith.constant dense<0.000000e+00> : vector<8x3xf32>
    %13 = tpu.matmul %11, %12, %cst_11 {dimension_numbers = #tpu.dot_dimension_numbers<[1], [0], [0], [1], [0, 0, 1, 1], [], []>} : vector<8x48xf32>, vector<48x3xf32>, vector<8x3xf32> -> vector<8x3xf32>
    %c0_12 = arith.constant 0 : index
    %c0_13 = arith.constant 0 : index
    %14 = vector.load %arg6[%c0_12, %c0_13] : memref<1x3xf32, #tpu.memory_space<vmem>>, vector<1x3xf32>
    %15 = vector.broadcast %14 : vector<1x3xf32> to vector<8x3xf32>
    %16 = arith.addf %13, %15 : vector<8x3xf32>
    %c0_14 = arith.constant 0 : index
    %c0_15 = arith.constant 0 : index
    %17 = vector.load %arg7[%c0_14, %c0_15] : memref<8x3xf32, #tpu.memory_space<vmem>>, vector<8x3xf32>
    tpu.vector_store %arg7[%c0_14, %c0_15], %16 {strides = array<i32>} : memref<8x3xf32, #tpu.memory_space<vmem>>, vector<8x3xf32>,
    return
  }
  func.func @transform_0(%arg0: i32) -> (i32, i32) {
    %c0_i32 = arith.constant 0 : i32
    %c0_i32_0 = arith.constant 0 : i32
    return %arg0, %c0_i32 : i32, i32
  }
  func.func @transform_1(%arg0: i32) -> (i32, i32) {
    %c0_i32 = arith.constant 0 : i32
    %c0_i32_0 = arith.constant 0 : i32
    %c0_i32_1 = arith.constant 0 : i32
    return %c0_i32, %c0_i32_0 : i32, i32
  }
  func.func @transform_2(%arg0: i32) -> (i32, i32) {
    %c0_i32 = arith.constant 0 : i32
    %c0_i32_0 = arith.constant 0 : i32
    %c0_i32_1 = arith.constant 0 : i32
    return %c0_i32, %c0_i32_0 : i32, i32
  }
  func.func @transform_3(%arg0: i32) -> (i32, i32) {
    %c0_i32 = arith.constant 0 : i32
    %c0_i32_0 = arith.constant 0 : i32
    %c0_i32_1 = arith.constant 0 : i32
    return %c0_i32, %c0_i32_0 : i32, i32
  }
  func.func @transform_4(%arg0: i32) -> (i32, i32) {
    %c0_i32 = arith.constant 0 : i32
    %c0_i32_0 = arith.constant 0 : i32
    %c0_i32_1 = arith.constant 0 : i32
    return %c0_i32, %c0_i32_0 : i32, i32
  }
  func.func @transform_5(%arg0: i32) -> (i32, i32) {
    %c0_i32 = arith.constant 0 : i32
    %c0_i32_0 = arith.constant 0 : i32
    %c0_i32_1 = arith.constant 0 : i32
    return %c0_i32, %c0_i32_0 : i32, i32
  }
  func.func @transform_6(%arg0: i32) -> (i32, i32) {
    %c0_i32 = arith.constant 0 : i32
    %c0_i32_0 = arith.constant 0 : i32
    return %arg0, %c0_i32 : i32, i32
  }
}

</mosaic_0001>

<llo_original>
// kernel: tpu_custom_call.1
$region0: #{tpu_custom_call.1}
  #allocation0 [shape = 'u32[]', space=smem, size = 0x4, offset = 0x4, fixed_abs, tag = 'smem constant byte address 0x4 - core index']
  #allocation1 [shape = 'u32[144,128]{1,0:T(1,128)}', space=vmem, size = 0x12000, scoped, tag = 'internal scratch']
  %s0 = inlined_call_operand.vmem [shape: f32[8,256], index: 0, kind: input, shape index: {}]
  %s1 = inlined_call_operand.vmem [shape: f32[256,448], index: 1, kind: input, shape index: {}]
  %s2 = inlined_call_operand.vmem [shape: f32[1,448], index: 2, kind: input, shape index: {}]
  %s3 = inlined_call_operand.vmem [shape: f32[448,48], index: 3, kind: input, shape index: {}]
  %s4 = inlined_call_operand.vmem [shape: f32[48,3], index: 4, kind: input, shape index: {}]
  %s5 = inlined_call_operand.vmem [shape: f32[1,3], index: 5, kind: input, shape index: {}]
  %s6 = inlined_call_operand.vmem [shape: f32[8,3], index: 6, kind: output, shape index: {}]
  %s7 = sld [smem:[#allocation0]]
  $region34: #{tpu_custom_call.1} parent=0
    _
  %s9 = ssub.s32 1, %s7
  %s10 = scalar_select 0, %s9, %s7
  // Predicated region
  $region2: #{tpu_custom_call.1} parent=0 // pred_check
    _
  $region3: #{tpu_custom_call.1} parent=0 // pred_check_branch
    %12 = sbr.rel (0) target = $region5
  $region4: #{tpu_custom_call.1} parent=0 // pred_region
    _
  $region5: #{tpu_custom_call.1} parent=0 // pred_fallthru
    _
  // Predicated region
  $region6: #{tpu_custom_call.1} parent=0 // pred_check
    _
  $region7: #{tpu_custom_call.1} parent=0 // pred_check_branch
    %14 = sbr.rel (0) target = $region9
  $region8: #{tpu_custom_call.1} parent=0 // pred_region
    _
  $region9: #{tpu_custom_call.1} parent=0 // pred_fallthru
    _
  // Predicated region
  $region10: #{tpu_custom_call.1} parent=0 // pred_check
    _
  $region11: #{tpu_custom_call.1} parent=0 // pred_check_branch
    %16 = sbr.rel (0) target = $region13
  $region12: #{tpu_custom_call.1} parent=0 // pred_region
    _
  $region13: #{tpu_custom_call.1} parent=0 // pred_fallthru
    _
  // Predicated region
  $region14: #{tpu_custom_call.1} parent=0 // pred_check
    _
  $region15: #{tpu_custom_call.1} parent=0 // pred_check_branch
    %18 = sbr.rel (0) target = $region17
  $region16: #{tpu_custom_call.1} parent=0 // pred_region
    _
  $region17: #{tpu_custom_call.1} parent=0 // pred_fallthru
    _
  // Predicated region
  $region18: #{tpu_custom_call.1} parent=0 // pred_check
    _
  $region19: #{tpu_custom_call.1} parent=0 // pred_check_branch
    %20 = sbr.rel (0) target = $region21
  $region20: #{tpu_custom_call.1} parent=0 // pred_region
    _
  $region21: #{tpu_custom_call.1} parent=0 // pred_fallthru
    _
  // Predicated region
  $region22: #{tpu_custom_call.1} parent=0 // pred_check
    _
  $region23: #{tpu_custom_call.1} parent=0 // pred_check_branch
    %22 = sbr.rel (0) target = $region25
  $region24: #{tpu_custom_call.1} parent=0 // pred_region
    _
  $region25: #{tpu_custom_call.1} parent=0 // pred_fallthru
    _
  %v23 = vld [vmem:[%s0] sm:$0xff]
  %v24 = vld [vmem:[%s0 + $0x8] sm:$0xff]
  %v25 = vld [vmem:[%s1] sm:$0xff]
  %v26 = vld [vmem:[%s1 + $0x8] sm:$0xff]
  %v27 = vld [vmem:[%s1 + $0x10] sm:$0xff]
  %v28 = vld [vmem:[%s1 + $0x18] sm:$0xff]
  %v29 = vld [vmem:[%s1 + $0x20] sm:$0xff]
  %v30 = vld [vmem:[%s1 + $0x28] sm:$0xff]
  %v31 = vld [vmem:[%s1 + $0x30] sm:$0xff]
  %v32 = vld [vmem:[%s1 + $0x38] sm:$0xff]
  %v33 = vld [vmem:[%s1 + $0x40] sm:$0xff]
  %v34 = vld [vmem:[%s1 + $0x48] sm:$0xff]
  %v35 = vld [vmem:[%s1 + $0x50] sm:$0xff]
  %v36 = vld [vmem:[%s1 + $0x58] sm:$0xff]
  %v37 = vld [vmem:[%s1 + $0x60] sm:$0xff]
  %v38 = vld [vmem:[%s1 + $0x68] sm:$0xff]
  %v39 = vld [vmem:[%s1 + $0x70] sm:$0xff]
  %v40 = vld [vmem:[%s1 + $0x78] sm:$0xff]
  %v41 = vld [vmem:[%s1 + $0x80] sm:$0xff]
  %v42 = vld [vmem:[%s1 + $0x88] sm:$0xff]
  %v43 = vld [vmem:[%s1 + $0x90] sm:$0xff]
  %v44 = vld [vmem:[%s1 + $0x98] sm:$0xff]
  %v45 = vld [vmem:[%s1 + $0xa0] sm:$0xff]
  %v46 = vld [vmem:[%s1 + $0xa8] sm:$0xff]
  %v47 = vld [vmem:[%s1 + $0xb0] sm:$0xff]
  %v48 = vld [vmem:[%s1 + $0xb8] sm:$0xff]
  %v49 = vld [vmem:[%s1 + $0xc0] sm:$0xff]
  %v50 = vld [vmem:[%s1 + $0xc8] sm:$0xff]
  %v51 = vld [vmem:[%s1 + $0xd0] sm:$0xff]
  %v52 = vld [vmem:[%s1 + $0xd8] sm:$0xff]
  %v53 = vld [vmem:[%s1 + $0xe0] sm:$0xff]
  %v54 = vld [vmem:[%s1 + $0xe8] sm:$0xff]
  %v55 = vld [vmem:[%s1 + $0xf0] sm:$0xff]
  %v56 = vld [vmem:[%s1 + $0xf8] sm:$0xff]
  %v57 = vld [vmem:[%s1 + $0x100] sm:$0xff]
  %v58 = vld [vmem:[%s1 + $0x108] sm:$0xff]
  %v59 = vld [vmem:[%s1 + $0x110] sm:$0xff]
  %v60 = vld [vmem:[%s1 + $0x118] sm:$0xff]
  %v61 = vld [vmem:[%s1 + $0x120] sm:$0xff]
  %v62 = vld [vmem:[%s1 + $0x128] sm:$0xff]
  %v63 = vld [vmem:[%s1 + $0x130] sm:$0xff]
  %v64 = vld [vmem:[%s1 + $0x138] sm:$0xff]
  %v65 = vld [vmem:[%s1 + $0x140] sm:$0xff]
  %v66 = vld [vmem:[%s1 + $0x148] sm:$0xff]
  %v67 = vld [vmem:[%s1 + $0x150] sm:$0xff]
  %v68 = vld [vmem:[%s1 + $0x158] sm:$0xff]
  %v69 = vld [vmem:[%s1 + $0x160] sm:$0xff]
  %v70 = vld [vmem:[%s1 + $0x168] sm:$0xff]
  %v71 = vld [vmem:[%s1 + $0x170] sm:$0xff]
  %v72 = vld [vmem:[%s1 + $0x178] sm:$0xff]
  %v73 = vld [vmem:[%s1 + $0x180] sm:$0xff]
  %v74 = vld [vmem:[%s1 + $0x188] sm:$0xff]
  %v75 = vld [vmem:[%s1 + $0x190] sm:$0xff]
  %v76 = vld [vmem:[%s1 + $0x198] sm:$0xff]
  %v77 = vld [vmem:[%s1 + $0x1a0] sm:$0xff]
  %v78 = vld [vmem:[%s1 + $0x1a8] sm:$0xff]
  %v79 = vld [vmem:[%s1 + $0x1b0] sm:$0xff]
  %v80 = vld [vmem:[%s1 + $0x1b8] sm:$0xff]
  %v81 = vld [vmem:[%s1 + $0x1c0] sm:$0xff]
  %v82 = vld [vmem:[%s1 + $0x1c8] sm:$0xff]
  %v83 = vld [vmem:[%s1 + $0x1d0] sm:$0xff]
  %v84 = vld [vmem:[%s1 + $0x1d8] sm:$0xff]
  %v85 = vld [vmem:[%s1 + $0x1e0] sm:$0xff]
  %v86 = vld [vmem:[%s1 + $0x1e8] sm:$0xff]
  %v87 = vld [vmem:[%s1 + $0x1f0] sm:$0xff]
  %v88 = vld [vmem:[%s1 + $0x1f8] sm:$0xff]
  %v89 = vld [vmem:[%s1 + $0x200] sm:$0xff]
  %v90 = vld [vmem:[%s1 + $0x208] sm:$0xff]
  %v91 = vld [vmem:[%s1 + $0x210] sm:$0xff]
  %v92 = vld [vmem:[%s1 + $0x218] sm:$0xff]
  %v93 = vld [vmem:[%s1 + $0x220] sm:$0xff]
  %v94 = vld [vmem:[%s1 + $0x228] sm:$0xff]
  %v95 = vld [vmem:[%s1 + $0x230] sm:$0xff]
  %v96 = vld [vmem:[%s1 + $0x238] sm:$0xff]
  %v97 = vld [vmem:[%s1 + $0x240] sm:$0xff]
  %v98 = vld [vmem:[%s1 + $0x248] sm:$0xff]
  %v99 = vld [vmem:[%s1 + $0x250] sm:$0xff]
  %v100 = vld [vmem:[%s1 + $0x258] sm:$0xff]
  %v101 = vld [vmem:[%s1 + $0x260] sm:$0xff]
  %v102 = vld [vmem:[%s1 + $0x268] sm:$0xff]
  %v103 = vld [vmem:[%s1 + $0x270] sm:$0xff]
  %v104 = vld [vmem:[%s1 + $0x278] sm:$0xff]
  %v105 = vld [vmem:[%s1 + $0x280] sm:$0xff]
  %v106 = vld [vmem:[%s1 + $0x288] sm:$0xff]
  %v107 = vld [vmem:[%s1 + $0x290] sm:$0xff]
  %v108 = vld [vmem:[%s1 + $0x298] sm:$0xff]
  %v109 = vld [vmem:[%s1 + $0x2a0] sm:$0xff]
  %v110 = vld [vmem:[%s1 + $0x2a8] sm:$0xff]
  %v111 = vld [vmem:[%s1 + $0x2b0] sm:$0xff]
  %v112 = vld [vmem:[%s1 + $0x2b8] sm:$0xff]
  %v113 = vld [vmem:[%s1 + $0x2c0] sm:$0xff]
  %v114 = vld [vmem:[%s1 + $0x2c8] sm:$0xff]
  %v115 = vld [vmem:[%s1 + $0x2d0] sm:$0xff]
  %v116 = vld [vmem:[%s1 + $0x2d8] sm:$0xff]
  %v117 = vld [vmem:[%s1 + $0x2e0] sm:$0xff]
  %v118 = vld [vmem:[%s1 + $0x2e8] sm:$0xff]
  %v119 = vld [vmem:[%s1 + $0x2f0] sm:$0xff]
  %v120 = vld [vmem:[%s1 + $0x2f8] sm:$0xff]
  %v121 = vld [vmem:[%s1 + $0x300] sm:$0xff]
  %v122 = vld [vmem:[%s1 + $0x308] sm:$0xff]
  %v123 = vld [vmem:[%s1 + $0x310] sm:$0xff]
  %v124 = vld [vmem:[%s1 + $0x318] sm:$0xff]
  %v125 = vld [vmem:[%s1 + $0x320] sm:$0xff]
  %v126 = vld [vmem:[%s1 + $0x328] sm:$0xff]
  %v127 = vld [vmem:[%s1 + $0x330] sm:$0xff]
  %v128 = vld [vmem:[%s1 + $0x338] sm:$0xff]
  %v129 = vld [vmem:[%s1 + $0x340] sm:$0xff]
  %v130 = vld [vmem:[%s1 + $0x348] sm:$0xff]
  %v131 = vld [vmem:[%s1 + $0x350] sm:$0xff]
  %v132 = vld [vmem:[%s1 + $0x358] sm:$0xff]
  %v133 = vld [vmem:[%s1 + $0x360] sm:$0xff]
  %v134 = vld [vmem:[%s1 + $0x368] sm:$0xff]
  %v135 = vld [vmem:[%s1 + $0x370] sm:$0xff]
  %v136 = vld [vmem:[%s1 + $0x378] sm:$0xff]
  %v137 = vld [vmem:[%s1 + $0x380] sm:$0xff]
  %v138 = vld [vmem:[%s1 + $0x388] sm:$0xff]
  %v139 = vld [vmem:[%s1 + $0x390] sm:$0xff]
  %v140 = vld [vmem:[%s1 + $0x398] sm:$0xff]
  %v141 = vld [vmem:[%s1 + $0x3a0] sm:$0xff]
  %v142 = vld [vmem:[%s1 + $0x3a8] sm:$0xff]
  %v143 = vld [vmem:[%s1 + $0x3b0] sm:$0xff]
  %v144 = vld [vmem:[%s1 + $0x3b8] sm:$0xff]
  %v145 = vld [vmem:[%s1 + $0x3c0] sm:$0xff]
  %v146 = vld [vmem:[%s1 + $0x3c8] sm:$0xff]
  %v147 = vld [vmem:[%s1 + $0x3d0] sm:$0xff]
  %v148 = vld [vmem:[%s1 + $0x3d8] sm:$0xff]
  %v149 = vld [vmem:[%s1 + $0x3e0] sm:$0xff]
  %v150 = vld [vmem:[%s1 + $0x3e8] sm:$0xff]
  %v151 = vld [vmem:[%s1 + $0x3f0] sm:$0xff]
  %v152 = vld [vmem:[%s1 + $0x3f8] sm:$0xff]
  %v153 = vld [vmem:[%s2] sm:$0xf]
  %v155 = vlaneseq
  %v156 = vshrl.u32 %v155, 7
  %v157 = vsub.s32 0, %v156
  %v158 = vrot.slane %v153, %v157
  %v159 = vlaneseq
  %v160 = vshrl.u32 %v159, 7
  %v161 = vsub.s32 1, %v160
  %v162 = vrot.slane %v153, %v161
  %v163 = vlaneseq
  %v164 = vshrl.u32 %v163, 7
  %v165 = vsub.s32 2, %v164
  %v166 = vrot.slane %v153, %v165
  %v167 = vlaneseq
  %v168 = vshrl.u32 %v167, 7
  %v169 = vsub.s32 3, %v168
  %v170 = vrot.slane %v153, %v169
  %175 = vmatprep.subr.mxu0 %v26
  %176 = vmatpush1.msra.mxu0 %v25
  %177 = vmatprep.subr.mxu0 %v30
  %178 = vmatpush1.msra.mxu0 %v29
  %179 = vmatprep.subr.mxu0 %v34
  %180 = vmatpush1.msra.mxu0 %v33
  %181 = vmatprep.subr.mxu0 %v38
  %182 = vmatpush1.msra.mxu0 %v37
  %183 = vmatprep.subr.mxu0 %v42
  %184 = vmatpush1.msra.mxu0 %v41
  %185 = vmatprep.subr.mxu0 %v46
  %186 = vmatpush1.msra.mxu0 %v45
  %187 = vmatprep.subr.mxu0 %v50
  %188 = vmatpush1.msra.mxu0 %v49
  %189 = vmatprep.subr.mxu0 %v54
  %190 = vmatpush1.msra.mxu0 %v53
  %191 = vmatprep.subr.mxu0 %v58
  %192 = vmatpush1.msra.mxu0 %v57
  %193 = vmatprep.subr.mxu0 %v62
  %194 = vmatpush1.msra.mxu0 %v61
  %195 = vmatprep.subr.mxu0 %v66
  %196 = vmatpush1.msra.mxu0 %v65
  %197 = vmatprep.subr.mxu0 %v70
  %198 = vmatpush1.msra.mxu0 %v69
  %199 = vmatprep.subr.mxu0 %v74
  %200 = vmatpush1.msra.mxu0 %v73
  %201 = vmatprep.subr.mxu0 %v78
  %202 = vmatpush1.msra.mxu0 %v77
  %203 = vmatprep.subr.mxu0 %v82
  %204 = vmatpush1.msra.mxu0 %v81
  %205 = vmatprep.subr.mxu0 %v86
  %206 = vmatpush1.msra.mxu0 %v85
  %207 = vmatprep.subr.mxu0 %v90
  %208 = vmatpush1.msra.mxu0 %v89
  %209 = vmatprep.subr.mxu0 %v94
  %210 = vmatpush1.msra.mxu0 %v93
  %211 = vmatprep.subr.mxu0 %v98
  %212 = vmatpush1.msra.mxu0 %v97
  %213 = vmatprep.subr.mxu0 %v102
  %214 = vmatpush1.msra.mxu0 %v101
  %215 = vmatprep.subr.mxu0 %v106
  %216 = vmatpush1.msra.mxu0 %v105
  %217 = vmatprep.subr.mxu0 %v110
  %218 = vmatpush1.msra.mxu0 %v109
  %219 = vmatprep.subr.mxu0 %v114
  %220 = vmatpush1.msra.mxu0 %v113
  %221 = vmatprep.subr.mxu0 %v118
  %222 = vmatpush1.msra.mxu0 %v117
  %223 = vmatprep.subr.mxu0 %v122
  %224 = vmatpush1.msra.mxu0 %v121
  %225 = vmatprep.subr.mxu0 %v126
  %226 = vmatpush1.msra.mxu0 %v125
  %227 = vmatprep.subr.mxu0 %v130
  %228 = vmatpush1.msra.mxu0 %v129
  %229 = vmatprep.subr.mxu0 %v134
  %230 = vmatpush1.msra.mxu0 %v133
  %231 = vmatprep.subr.mxu0 %v138
  %232 = vmatpush1.msra.mxu0 %v137
  %233 = vmatprep.subr.mxu0 %v142
  %234 = vmatpush1.msra.mxu0 %v141
  %235 = vmatprep.subr.mxu0 %v146
  %236 = vmatpush1.msra.mxu0 %v145
  %237 = vmatprep.subr.mxu0 %v150
  %238 = vmatpush1.msra.mxu0 %v149
  %239 = vmatprep.mubr.f32.mxu0 %v24
  %240 = vmatmul.mubr.f32.gmra.mrb[0].mxu0 %v23
  %v241 = vpop.f32.mrb[0].mxu0
  %v242 = vadd.f32 %v158, %v241
  %v243 = vpop.f32.mrb[0].mxu0
  %v244 = vadd.f32 %v162, %v243
  %245 = vdwg.mxu0
  %246 = vmatprep.subr.mxu0 %v28
  %247 = vmatpush1.msra.mxu0 %v27
  %248 = vmatprep.subr.mxu0 %v32
  %249 = vmatpush1.msra.mxu0 %v31
  %250 = vmatprep.subr.mxu0 %v36
  %251 = vmatpush1.msra.mxu0 %v35
  %252 = vmatprep.subr.mxu0 %v40
  %253 = vmatpush1.msra.mxu0 %v39
  %254 = vmatprep.subr.mxu0 %v44
  %255 = vmatpush1.msra.mxu0 %v43
  %256 = vmatprep.subr.mxu0 %v48
  %257 = vmatpush1.msra.mxu0 %v47
  %258 = vmatprep.subr.mxu0 %v52
  %259 = vmatpush1.msra.mxu0 %v51
  %260 = vmatprep.subr.mxu0 %v56
  %261 = vmatpush1.msra.mxu0 %v55
  %262 = vmatprep.subr.mxu0 %v60
  %263 = vmatpush1.msra.mxu0 %v59
  %264 = vmatprep.subr.mxu0 %v64
  %265 = vmatpush1.msra.mxu0 %v63
  %266 = vmatprep.subr.mxu0 %v68
  %267 = vmatpush1.msra.mxu0 %v67
  %268 = vmatprep.subr.mxu0 %v72
  %269 = vmatpush1.msra.mxu0 %v71
  %270 = vmatprep.subr.mxu0 %v76
  %271 = vmatpush1.msra.mxu0 %v75
  %272 = vmatprep.subr.mxu0 %v80
  %273 = vmatpush1.msra.mxu0 %v79
  %274 = vmatprep.subr.mxu0 %v84
  %275 = vmatpush1.msra.mxu0 %v83
  %276 = vmatprep.subr.mxu0 %v88
  %277 = vmatpush1.msra.mxu0 %v87
  %278 = vmatprep.subr.mxu0 %v92
  %279 = vmatpush1.msra.mxu0 %v91
  %280 = vmatprep.subr.mxu0 %v96
  %281 = vmatpush1.msra.mxu0 %v95
  %282 = vmatprep.subr.mxu0 %v100
  %283 = vmatpush1.msra.mxu0 %v99
  %284 = vmatprep.subr.mxu0 %v104
  %285 = vmatpush1.msra.mxu0 %v103
  %286 = vmatprep.subr.mxu0 %v108
  %287 = vmatpush1.msra.mxu0 %v107
  %288 = vmatprep.subr.mxu0 %v112
  %289 = vmatpush1.msra.mxu0 %v111
  %290 = vmatprep.subr.mxu0 %v116
  %291 = vmatpush1.msra.mxu0 %v115
  %292 = vmatprep.subr.mxu0 %v120
  %293 = vmatpush1.msra.mxu0 %v119
  %294 = vmatprep.subr.mxu0 %v124
  %295 = vmatpush1.msra.mxu0 %v123
  %296 = vmatprep.subr.mxu0 %v128
  %297 = vmatpush1.msra.mxu0 %v127
  %298 = vmatprep.subr.mxu0 %v132
  %299 = vmatpush1.msra.mxu0 %v131
  %300 = vmatprep.subr.mxu0 %v136
  %301 = vmatpush1.msra.mxu0 %v135
  %302 = vmatprep.subr.mxu0 %v140
  %303 = vmatpush1.msra.mxu0 %v139
  %304 = vmatprep.subr.mxu0 %v144
  %305 = vmatpush1.msra.mxu0 %v143
  %306 = vmatprep.subr.mxu0 %v148
  %307 = vmatpush1.msra.mxu0 %v147
  %308 = vmatprep.subr.mxu0 %v152
  %309 = vmatpush1.msra.mxu0 %v151
  %310 = vmatprep.mubr.f32.mxu0 %v24
  %311 = vmatmul.mubr.f32.gmra.mrb[0].mxu0 %v23
  %v312 = vpop.f32.mrb[0].mxu0
  %v313 = vadd.f32 %v166, %v312
  %v314 = vpop.f32.mrb[0].mxu0
  %v315 = vadd.f32 %v170, %v314
  %316 = vdwg.mxu0
  %v317 = vmul.f32 %v242, %v242
  %v318 = vmul.f32 %v244, %v244
  %v319 = vmul.f32 %v313, %v313
  %v320 = vmul.f32 %v315, %v315
  %v321 = vld [vmem:[%s3] sm:$0xff]
  %v322 = vld [vmem:[%s3 + $0x8] sm:$0xff]
  %v323 = vld [vmem:[%s3 + $0x10] sm:$0xff]
  %v324 = vld [vmem:[%s3 + $0x18] sm:$0xff]
  %v325 = vld [vmem:[%s3 + $0x20] sm:$0xff]
  %v326 = vld [vmem:[%s3 + $0x28] sm:$0xff]
  %v327 = vld [vmem:[%s3 + $0x30] sm:$0xff]
  %v328 = vld [vmem:[%s3 + $0x38] sm:$0xff]
  %v329 = vld [vmem:[%s3 + $0x40] sm:$0xff]
  %v330 = vld [vmem:[%s3 + $0x48] sm:$0xff]
  %v331 = vld [vmem:[%s3 + $0x50] sm:$0xff]
  %v332 = vld [vmem:[%s3 + $0x58] sm:$0xff]
  %v333 = vld [vmem:[%s3 + $0x60] sm:$0xff]
  %v334 = vld [vmem:[%s3 + $0x68] sm:$0xff]
  %v335 = vld [vmem:[%s3 + $0x70] sm:$0xff]
  %v336 = vld [vmem:[%s3 + $0x78] sm:$0xff]
  %v337 = vld [vmem:[%s3 + $0x80] sm:$0xff]
  %v338 = vld [vmem:[%s3 + $0x88] sm:$0xff]
  %v339 = vld [vmem:[%s3 + $0x90] sm:$0xff]
  %v340 = vld [vmem:[%s3 + $0x98] sm:$0xff]
  %v341 = vld [vmem:[%s3 + $0xa0] sm:$0xff]
  %v342 = vld [vmem:[%s3 + $0xa8] sm:$0xff]
  %v343 = vld [vmem:[%s3 + $0xb0] sm:$0xff]
  %v344 = vld [vmem:[%s3 + $0xb8] sm:$0xff]
  %v345 = vld [vmem:[%s3 + $0xc0] sm:$0xff]
  %v346 = vld [vmem:[%s3 + $0xc8] sm:$0xff]
  %v347 = vld [vmem:[%s3 + $0xd0] sm:$0xff]
  %v348 = vld [vmem:[%s3 + $0xd8] sm:$0xff]
  %v349 = vld [vmem:[%s3 + $0xe0] sm:$0xff]
  %v350 = vld [vmem:[%s3 + $0xe8] sm:$0xff]
  %v351 = vld [vmem:[%s3 + $0xf0] sm:$0xff]
  %v352 = vld [vmem:[%s3 + $0xf8] sm:$0xff]
  %v353 = vld [vmem:[%s3 + $0x100] sm:$0xff]
  %v354 = vld [vmem:[%s3 + $0x108] sm:$0xff]
  %v355 = vld [vmem:[%s3 + $0x110] sm:$0xff]
  %v356 = vld [vmem:[%s3 + $0x118] sm:$0xff]
  %v357 = vld [vmem:[%s3 + $0x120] sm:$0xff]
  %v358 = vld [vmem:[%s3 + $0x128] sm:$0xff]
  %v359 = vld [vmem:[%s3 + $0x130] sm:$0xff]
  %v360 = vld [vmem:[%s3 + $0x138] sm:$0xff]
  %v361 = vld [vmem:[%s3 + $0x140] sm:$0xff]
  %v362 = vld [vmem:[%s3 + $0x148] sm:$0xff]
  %v363 = vld [vmem:[%s3 + $0x150] sm:$0xff]
  %v364 = vld [vmem:[%s3 + $0x158] sm:$0xff]
  %v365 = vld [vmem:[%s3 + $0x160] sm:$0xff]
  %v366 = vld [vmem:[%s3 + $0x168] sm:$0xff]
  %v367 = vld [vmem:[%s3 + $0x170] sm:$0xff]
  %v368 = vld [vmem:[%s3 + $0x178] sm:$0xff]
  %v369 = vld [vmem:[%s3 + $0x180] sm:$0xff]
  %v370 = vld [vmem:[%s3 + $0x188] sm:$0xff]
  %v371 = vld [vmem:[%s3 + $0x190] sm:$0xff]
  %v372 = vld [vmem:[%s3 + $0x198] sm:$0xff]
  %v373 = vld [vmem:[%s3 + $0x1a0] sm:$0xff]
  %v374 = vld [vmem:[%s3 + $0x1a8] sm:$0xff]
  %v375 = vld [vmem:[%s3 + $0x1b0] sm:$0xff]
  %v376 = vld [vmem:[%s3 + $0x1b8] sm:$0xff]
  %vm377 = vcmask 523264
  %v379 = vsel %vm377, %v320, 0
  %381 = vmatprep.subr.mxu0 0.0
  %382 = vmatpush1.msra.mxu0 %v321
  %383 = vmatprep.subr.mxu0 0.0
  %384 = vmatpush1.msra.mxu0 %v322
  %385 = vmatprep.subr.mxu0 0.0
  %386 = vmatpush1.msra.mxu0 %v323
  %387 = vmatprep.subr.mxu0 0.0
  %388 = vmatpush1.msra.mxu0 %v324
  %389 = vmatprep.subr.mxu0 0.0
  %390 = vmatpush1.msra.mxu0 %v325
  %391 = vmatprep.subr.mxu0 0.0
  %392 = vmatpush1.msra.mxu0 %v326
  %393 = vmatprep.subr.mxu0 0.0
  %394 = vmatpush1.msra.mxu0 %v327
  %395 = vmatprep.subr.mxu0 0.0
  %396 = vmatpush1.msra.mxu0 %v328
  %397 = vmatprep.subr.mxu0 0.0
  %398 = vmatpush1.msra.mxu0 %v329
  %399 = vmatprep.subr.mxu0 0.0
  %400 = vmatpush1.msra.mxu0 %v330
  %401 = vmatprep.subr.mxu0 0.0
  %402 = vmatpush1.msra.mxu0 %v331
  %403 = vmatprep.subr.mxu0 0.0
  %404 = vmatpush1.msra.mxu0 %v332
  %405 = vmatprep.subr.mxu0 0.0
  %406 = vmatpush1.msra.mxu0 %v333
  %407 = vmatprep.subr.mxu0 0.0
  %408 = vmatpush1.msra.mxu0 %v334
  %409 = vmatprep.subr.mxu0 0.0
  %410 = vmatpush1.msra.mxu0 %v335
  %411 = vmatprep.subr.mxu0 0.0
  %412 = vmatpush1.msra.mxu0 %v336
  %413 = vmatprep.subr.mxu0 0.0
  %414 = vmatpush1.msra.mxu0 %v337
  %415 = vmatprep.subr.mxu0 0.0
  %416 = vmatpush1.msra.mxu0 %v338
  %417 = vmatprep.subr.mxu0 0.0
  %418 = vmatpush1.msra.mxu0 %v339
  %419 = vmatprep.subr.mxu0 0.0
  %420 = vmatpush1.msra.mxu0 %v340
  %421 = vmatprep.subr.mxu0 0.0
  %422 = vmatpush1.msra.mxu0 %v341
  %423 = vmatprep.subr.mxu0 0.0
  %424 = vmatpush1.msra.mxu0 %v342
  %425 = vmatprep.subr.mxu0 0.0
  %426 = vmatpush1.msra.mxu0 %v343
  %427 = vmatprep.subr.mxu0 0.0
  %428 = vmatpush1.msra.mxu0 %v344
  %429 = vmatprep.subr.mxu0 0.0
  %430 = vmatpush1.msra.mxu0 %v345
  %431 = vmatprep.subr.mxu0 0.0
  %432 = vmatpush1.msra.mxu0 %v346
  %433 = vmatprep.subr.mxu0 0.0
  %434 = vmatpush1.msra.mxu0 %v347
  %435 = vmatprep.subr.mxu0 0.0
  %436 = vmatpush1.msra.mxu0 %v348
  %437 = vmatprep.subr.mxu0 0.0
  %438 = vmatpush1.msra.mxu0 %v349
  %439 = vmatprep.subr.mxu0 0.0
  %440 = vmatpush1.msra.mxu0 %v350
  %441 = vmatprep.subr.mxu0 0.0
  %442 = vmatpush1.msra.mxu0 %v351
  %443 = vmatprep.subr.mxu0 0.0
  %444 = vmatpush1.msra.mxu0 %v352
  %445 = vmatprep.mubr.f32.mxu0 %v318
  %446 = vmatmul.mubr.f32.gmra.mrb[0].mxu0 %v317
  %v447 = vpop.f32.mrb[0].mxu0
  %v448 = vadd.f32 0.0, %v447
  %v449 = vpop.f32.mrb[0].mxu0
  %450 = vdwg.mxu0
  %451 = vmatprep.subr.mxu0 0.0
  %452 = vmatpush1.msra.mxu0 %v353
  %453 = vmatprep.subr.mxu0 0.0
  %454 = vmatpush1.msra.mxu0 %v354
  %455 = vmatprep.subr.mxu0 0.0
  %456 = vmatpush1.msra.mxu0 %v355
  %457 = vmatprep.subr.mxu0 0.0
  %458 = vmatpush1.msra.mxu0 %v356
  %459 = vmatprep.subr.mxu0 0.0
  %460 = vmatpush1.msra.mxu0 %v357
  %461 = vmatprep.subr.mxu0 0.0
  %462 = vmatpush1.msra.mxu0 %v358
  %463 = vmatprep.subr.mxu0 0.0
  %464 = vmatpush1.msra.mxu0 %v359
  %465 = vmatprep.subr.mxu0 0.0
  %466 = vmatpush1.msra.mxu0 %v360
  %467 = vmatprep.subr.mxu0 0.0
  %468 = vmatpush1.msra.mxu0 %v361
  %469 = vmatprep.subr.mxu0 0.0
  %470 = vmatpush1.msra.mxu0 %v362
  %471 = vmatprep.subr.mxu0 0.0
  %472 = vmatpush1.msra.mxu0 %v363
  %473 = vmatprep.subr.mxu0 0.0
  %474 = vmatpush1.msra.mxu0 %v364
  %475 = vmatprep.subr.mxu0 0.0
  %476 = vmatpush1.msra.mxu0 %v365
  %477 = vmatprep.subr.mxu0 0.0
  %478 = vmatpush1.msra.mxu0 %v366
  %479 = vmatprep.subr.mxu0 0.0
  %480 = vmatpush1.msra.mxu0 %v367
  %481 = vmatprep.subr.mxu0 0.0
  %482 = vmatpush1.msra.mxu0 %v368
  %483 = vmatprep.subr.mxu0 0.0
  %484 = vmatpush1.msra.mxu0 %v369
  %485 = vmatprep.subr.mxu0 0.0
  %486 = vmatpush1.msra.mxu0 %v370
  %487 = vmatprep.subr.mxu0 0.0
  %488 = vmatpush1.msra.mxu0 %v371
  %489 = vmatprep.subr.mxu0 0.0
  %490 = vmatpush1.msra.mxu0 %v372
  %491 = vmatprep.subr.mxu0 0.0
  %492 = vmatpush1.msra.mxu0 %v373
  %493 = vmatprep.subr.mxu0 0.0
  %494 = vmatpush1.msra.mxu0 %v374
  %495 = vmatprep.subr.mxu0 0.0
  %496 = vmatpush1.msra.mxu0 %v375
  %497 = vmatprep.subr.mxu0 0.0
  %498 = vmatpush1.msra.mxu0 %v376
  %499 = vmatprep.subr.mxu0 0.0
  %500 = vmatpush1.msra.mxu0 0.0
  %501 = vmatprep.subr.mxu0 0.0
  %502 = vmatpush1.msra.mxu0 0.0
  %503 = vmatprep.subr.mxu0 0.0
  %504 = vmatpush1.msra.mxu0 0.0
  %505 = vmatprep.subr.mxu0 0.0
  %506 = vmatpush1.msra.mxu0 0.0
  %507 = vmatprep.subr.mxu0 0.0
  %508 = vmatpush1.msra.mxu0 0.0
  %509 = vmatprep.subr.mxu0 0.0
  %510 = vmatpush1.msra.mxu0 0.0
  %511 = vmatprep.subr.mxu0 0.0
  %512 = vmatpush1.msra.mxu0 0.0
  %513 = vmatprep.subr.mxu0 0.0
  %514 = vmatpush1.msra.mxu0 0.0
  %515 = vmatprep.mubr.f32.mxu0 %v379
  %516 = vmatmul.mubr.f32.gmra.mrb[0].mxu0 %v319
  %v517 = vpop.f32.mrb[0].mxu0
  %v518 = vadd.f32 %v448, %v517
  %v519 = vpop.f32.mrb[0].mxu0
  %520 = vdwg.mxu0
  %v521 = vmax.f32 %v518, 1e-06
  %v522 = vlog2.pop %v521
  %v523 = vmul.f32 %v522, 0.6931472
  %v524 = vld [vmem:[%s4] sm:$0xff]
  %v525 = vld [vmem:[%s4 + $0x8] sm:$0xff]
  %v526 = vld [vmem:[%s4 + $0x10] sm:$0xff]
  %v527 = vld [vmem:[%s4 + $0x18] sm:$0xff]
  %v528 = vld [vmem:[%s4 + $0x20] sm:$0xff]
  %v529 = vld [vmem:[%s4 + $0x28] sm:$0xff]
  %v530 = vld [vmem:[%s5] sm:$0x1]
  %v532 = vlaneseq
  %v533 = vshrl.u32 %v532, 7
  %v534 = vsub.s32 0, %v533
  %v535 = vrot.slane %v530, %v534
  %vm537 = vcmask 392192
  %v539 = vsel %vm537, %v523, 0
  %541 = vmatprep.subr.mxu0 0.0
  %542 = vmatpush1.msra.mxu0 %v524
  %543 = vmatprep.subr.mxu0 0.0
  %544 = vmatpush1.msra.mxu0 %v525
  %545 = vmatprep.subr.mxu0 0.0
  %546 = vmatpush1.msra.mxu0 %v526
  %547 = vmatprep.subr.mxu0 0.0
  %548 = vmatpush1.msra.mxu0 %v527
  %549 = vmatprep.subr.mxu0 0.0
  %550 = vmatpush1.msra.mxu0 %v528
  %551 = vmatprep.subr.mxu0 0.0
  %552 = vmatpush1.msra.mxu0 %v529
  %553 = vmatprep.subr.mxu0 0.0
  %554 = vmatpush1.msra.mxu0 0.0
  %555 = vmatprep.subr.mxu0 0.0
  %556 = vmatpush1.msra.mxu0 0.0
  %557 = vmatprep.subr.mxu0 0.0
  %558 = vmatpush1.msra.mxu0 0.0
  %559 = vmatprep.subr.mxu0 0.0
  %560 = vmatpush1.msra.mxu0 0.0
  %561 = vmatprep.subr.mxu0 0.0
  %562 = vmatpush1.msra.mxu0 0.0
  %563 = vmatprep.subr.mxu0 0.0
  %564 = vmatpush1.msra.mxu0 0.0
  %565 = vmatprep.subr.mxu0 0.0
  %566 = vmatpush1.msra.mxu0 0.0
  %567 = vmatprep.subr.mxu0 0.0
  %568 = vmatpush1.msra.mxu0 0.0
  %569 = vmatprep.subr.mxu0 0.0
  %570 = vmatpush1.msra.mxu0 0.0
  %571 = vmatprep.subr.mxu0 0.0
  %572 = vmatpush1.msra.mxu0 0.0
  %573 = vmatprep.subr.mxu0 0.0
  %574 = vmatpush1.msra.mxu0 0.0
  %575 = vmatprep.subr.mxu0 0.0
  %576 = vmatpush1.msra.mxu0 0.0
  %577 = vmatprep.subr.mxu0 0.0
  %578 = vmatpush1.msra.mxu0 0.0
  %579 = vmatprep.subr.mxu0 0.0
  %580 = vmatpush1.msra.mxu0 0.0
  %581 = vmatprep.subr.mxu0 0.0
  %582 = vmatpush1.msra.mxu0 0.0
  %583 = vmatprep.subr.mxu0 0.0
  %584 = vmatpush1.msra.mxu0 0.0
  %585 = vmatprep.subr.mxu0 0.0
  %586 = vmatpush1.msra.mxu0 0.0
  %587 = vmatprep.subr.mxu0 0.0
  %588 = vmatpush1.msra.mxu0 0.0
  %589 = vmatprep.subr.mxu0 0.0
  %590 = vmatpush1.msra.mxu0 0.0
  %591 = vmatprep.subr.mxu0 0.0
  %592 = vmatpush1.msra.mxu0 0.0
  %593 = vmatprep.subr.mxu0 0.0
  %594 = vmatpush1.msra.mxu0 0.0
  %595 = vmatprep.subr.mxu0 0.0
  %596 = vmatpush1.msra.mxu0 0.0
  %597 = vmatprep.subr.mxu0 0.0
  %598 = vmatpush1.msra.mxu0 0.0
  %599 = vmatprep.subr.mxu0 0.0
  %600 = vmatpush1.msra.mxu0 0.0
  %601 = vmatprep.subr.mxu0 0.0
  %602 = vmatpush1.msra.mxu0 0.0
  %603 = vmatprep.subr.mxu0 0.0
  %604 = vmatpush1.msra.mxu0 0.0
  %605 = vmatprep.mubr.f32.mxu0 0.0
  %606 = vmatmul.mubr.f32.gmra.mrb[0].mxu0 %v539
  %v607 = vpop.f32.mrb[0].mxu0
  %v608 = vadd.f32 %v535, %v607
  %v609 = vpop.f32.mrb[0].mxu0
  %610 = vdwg.mxu0
  %vm611 = vcmask 23552
  %612 = vst.msk [vmem:[%s6] sm:$0xff] %vm611, %v608
  // Predicated region
  $region26: #{tpu_custom_call.1} parent=0 // pred_check
    _
  $region27: #{tpu_custom_call.1} parent=0 // pred_check_branch
    %614 = sbr.rel (0) target = $region29
  $region28: #{tpu_custom_call.1} parent=0 // pred_region
    _
  $region29: #{tpu_custom_call.1} parent=0 // pred_fallthru
    _
  // Predicated region
  $region30: #{tpu_custom_call.1} parent=0 // pred_check
    _
  $region31: #{tpu_custom_call.1} parent=0 // pred_check_branch
    %616 = sbr.rel (0) target = $region33
  $region32: #{tpu_custom_call.1} parent=0 // pred_region
    _
  $region33: #{tpu_custom_call.1} parent=0 // pred_fallthru
    _

</llo_original>
